<compile_context>
chip_gen: v7x
topology: tpu7x:2x2x1
jax: 0.10.0
libtpu: 0.0.40
codegen_flags: <defaults>
</compile_context>

<pallas_src>
import math
from functools import partial

import jax
import jax.numpy as jnp
from jax.experimental import pallas as pl
from jax.experimental.pallas import tpu as pltpu


def _round_up(x, m):
    return ((x + m - 1) // m) * m


def _pick_tile(size, unit, cap):
    """Tile size (multiple of `unit`, <= cap) minimizing padded size; prefer larger."""
    size_u = _round_up(max(size, 1), unit)
    best_t, best_pad = unit, _round_up(size_u, unit)
    t = unit
    while t <= cap:
        pad = _round_up(size_u, t)
        if pad < best_pad or (pad == best_pad and t > best_t):
            best_t, best_pad = t, pad
        t += unit
    return best_t, best_pad


def _tpu_defaults():
    """(tm_cap, tn_cap, vmem_limit_bytes) tuned per TPU generation."""
    vmem_cap = 128 * 1024 * 1024
    try:
        vmem_cap = int(pltpu.get_tpu_info().vmem_capacity_bytes)
    except Exception:
        pass
    kind = ""
    try:
        kind = jax.devices()[0].device_kind.lower()
    except Exception:
        pass
    is_v5 = "v5" in kind
    is_v6 = "v6" in kind
    tm_cap = 128 if is_v5 else 256   # v5e MXU is 128-wide on M; bigger TM only grows acc traffic
    tn_cap = 1024 if is_v6 else 512  # v6e: 128 MiB VMEM -> larger Lout tiles pay off
    # Real per-generation budget: never exceed physical VMEM minus compiler-scratch headroom.
    vmem_limit = max(32 << 20, min(100 << 20, vmem_cap - (16 << 20)))
    return tm_cap, tn_cap, vmem_limit


def _phconv_kernel(*refs, S, Q, TN, HW):
    # refs = (w_ref, xc_ref[, xh_ref], o_ref)
    #   w_ref : (S, TM, Q*Cin_pad)  packed per-phase weights (taps along contraction)
    #   xc_ref: (S, Cin_pad, TN)    current Lout tile (stride-phase planes)
    #   xh_ref: (S, Cin_pad, HW)    head of the NEXT tile (halo), present iff Q > 1
    #   o_ref : (TM, TN)            f32 lane-dense output tile
    if Q > 1:
        w_ref, xc_ref, xh_ref, o_ref = refs
    else:
        w_ref, xc_ref, o_ref = refs

    acc = None
    for r in range(S):
        cur = xc_ref[r]                                      # (Cin_pad, TN)
        if Q > 1:
            # Fold all q>0 tap shifts into the one-time assembly of a single
            # packed operand -> ONE matmul per stride phase (no per-tap acc RMW).
            xw = jnp.concatenate([cur, xh_ref[r]], axis=1)   # (Cin_pad, TN + HW)
            chunks = [cur] + [xw[:, q:q + TN] for q in range(1, Q)]
            xp = jnp.concatenate(chunks, axis=0)             # (Q*Cin_pad, TN)
        else:
            xp = cur
        part = jnp.dot(w_ref[r], xp, preferred_element_type=jnp.float32)
        acc = part if acc is None else acc + part
    o_ref[...] = acc.astype(o_ref.dtype)


@partial(jax.jit, static_argnames=("stride", "padding", "compute_dtype"))
def _ph_conv1d(x, A, Fw, *, stride, padding, compute_dtype):
    B, Cin, L = x.shape
    n = A.shape[0]
    Osub, Isub, K = Fw.shape[1], Fw.shape[2], Fw.shape[3]
    Cout = n * Osub
    assert Cin == n * Isub, (Cin, n, Isub)
    S = int(stride)
    assert L + 2 * padding >= K, "input (with padding) shorter than kernel"

    Lout = (L + 2 * padding - K) // S + 1
    Q = -(-K // S)                       # taps per stride phase (ceil(K / S))
    assert Q - 1 <= 128, "kernel_size too large for the 128-lane halo path"

    tm_cap, tn_cap, vmem_limit = _tpu_defaults()
    TM, Cout_pad = _pick_tile(Cout, 16, tm_cap)
    TN, Lout_pad = _pick_tile(Lout, 128, tn_cap)
    Cin_pad = _round_up(Cin, 16)         # sublane-tile aligned packed-contraction chunks
    HW = 128                             # halo block width (one lane tile)
    QC = Q * Cin_pad

    # --- weights: kron-sum, then phase-grouped tap packing along the contraction dim
    # weight[a*Osub + c, b*Isub + d, k] = sum_n A[n,a,b] * F[n,c,d,k]
    w = jnp.einsum("nab,ncdk->acbdk", A, Fw).reshape(Cout, Cin, K)
    w = jnp.pad(w, ((0, Cout_pad - Cout), (0, Cin_pad - Cin), (0, S * Q - K)))
    w = w.reshape(Cout_pad, Cin_pad, Q, S)        # [co, ci, q, r] = W[co, ci, q*S + r]
    w = w.transpose(3, 0, 2, 1).reshape(S, Cout_pad, QC).astype(compute_dtype)

    # --- x: stride-phase planes x_phase[b, r, ci, m] = x_pad[b, ci, m*S + r]
    Lx = Lout_pad + (HW if Q > 1 else 0)          # +1 lane-tile so the halo block exists
    total = S * Lx
    back = max(total - padding - L, 0)
    x_ext = jnp.pad(x, ((0, 0), (0, Cin_pad - Cin), (padding, back)))[:, :, :total]
    if S == 1:
        x_phase = x_ext[:, None, :, :]            # stride-1 fast path: no phase transpose
    else:
        x_phase = x_ext.reshape(B, Cin_pad, Lx, S).transpose(0, 3, 1, 2)
    x_phase = x_phase.astype(compute_dtype)       # (B, S, Cin_pad, Lx)

    grid = (B, Cout_pad // TM, Lout_pad // TN)

    in_specs = [
        # weights: constant along b, j -> re-DMA'd only when the Cout tile changes
        pl.BlockSpec((S, TM, QC), lambda b, i, j: (0, i, 0)),
        # current Lout tile of x: streamed/pipelined along the fastest (j) axis
        pl.BlockSpec((None, S, Cin_pad, TN), lambda b, i, j: (b, 0, 0, j)),
    ]
    operands = [w, x_phase]
    if Q > 1:
        # halo: first HW lanes of the NEXT tile (element offset (j+1)*TN)
        in_specs.append(
            pl.BlockSpec((None, S, Cin_pad, HW),
                         lambda b, i, j: (b, 0, 0, (j + 1) * (TN // HW))))
        operands.append(x_phase)

    kernel = partial(_phconv_kernel, S=S, Q=Q, TN=TN, HW=HW)

    out_pad = pl.pallas_call(
        kernel,
        out_shape=jax.ShapeDtypeStruct((B, Cout_pad, Lout_pad), jnp.float32),
        grid=grid,
        in_specs=in_specs,
        out_specs=pl.BlockSpec((None, TM, TN), lambda b, i, j: (b, i, j)),
        compiler_params=pltpu.CompilerParams(
            dimension_semantics=("parallel", "parallel", "parallel"),
            vmem_limit_bytes=vmem_limit,
        ),
    )(*operands)

    if Cout_pad == Cout and Lout_pad == Lout:
        return out_pad
    return out_pad[:, :Cout, :Lout]


def ph_conv1d_pallas(x, A, Fw, *, stride=1, padding=0, compute_dtype=jnp.bfloat16):
    """PHConv1d forward.  x: (B, Cin, L); A: (n, n, n); Fw: (n, Cout//n, Cin//n, K)."""
    return _ph_conv1d(x, A, Fw, stride=stride, padding=padding,
                      compute_dtype=compute_dtype)


# ------------------------------- main ----------------------------------------

if __name__ == "__main__":
    def init_params(key, n, in_features, out_features, kernel_size):
        kA, kF = jax.random.split(key)
        a_bound = math.sqrt(6.0 / (n * n + n * n))          # xavier_uniform on (n,n,n)
        A = jax.random.uniform(kA, (n, n, n), jnp.float32, -a_bound, a_bound)
        f_fan_in = (in_features // n) * kernel_size
        f_fan_out = (out_features // n) * kernel_size
        f_bound = math.sqrt(6.0 / (f_fan_in + f_fan_out))   # xavier_uniform on F
        Fw = jax.random.uniform(
            kF, (n, out_features // n, in_features // n, kernel_size),
            jnp.float32, -f_bound, f_bound)
        return A, Fw

    def reference(x, A, Fw, stride, padding):
        Cout = A.shape[0] * Fw.shape[1]
        Cin = A.shape[0] * Fw.shape[2]
        K = Fw.shape[3]
        w = jnp.einsum("nab,ncdk->acbdk", A, Fw).reshape(Cout, Cin, K)
        return jax.lax.conv_general_dilated(
            x, w, window_strides=(stride,), padding=[(padding, padding)],
            dimension_numbers=("NCH", "OIH", "NCH"))

    key = jax.random.PRNGKey(0)
    k1, k2, kx1, kx2 = jax.random.split(key, 4)

    # Case 1: n=2, Cin=4, Cout=8, K=3, stride=1, padding=1, x=(2, 4, 16)
    A1, F1 = init_params(k1, 2, 4, 8, 3)
    x1 = jax.random.normal(kx1, (2, 4, 16), jnp.float32)
    out_bf16 = jax.block_until_ready(ph_conv1d_pallas(x1, A1, F1, stride=1, padding=1))
    out_f32 = jax.block_until_ready(
        ph_conv1d_pallas(x1, A1, F1, stride=1, padding=1, compute_dtype=jnp.float32))
    ref1 = reference(x1, A1, F1, 1, 1)
    assert out_bf16.shape == ref1.shape, (out_bf16.shape, ref1.shape)
    assert jnp.allclose(out_bf16, ref1, atol=5e-2, rtol=5e-2), \
        float(jnp.max(jnp.abs(out_bf16 - ref1)))
    assert jnp.allclose(out_f32, ref1, atol=1e-4, rtol=1e-4), \
        float(jnp.max(jnp.abs(out_f32 - ref1)))

    # Case 2 (strided, multi-phase tap packing): n=2, K=4, stride=2, padding=1
    A2, F2 = init_params(k2, 2, 4, 8, 4)
    x2 = jax.random.normal(kx2, (2, 4, 16), jnp.float32)
    out2 = jax.block_until_ready(ph_conv1d_pallas(x2, A2, F2, stride=2, padding=1))
    ref2 = reference(x2, A2, F2, 2, 1)
    assert out2.shape == ref2.shape, (out2.shape, ref2.shape)
    assert jnp.allclose(out2, ref2, atol=5e-2, rtol=5e-2), \
        float(jnp.max(jnp.abs(out2 - ref2)))

    print("KERNEL_OK")
</pallas_src>

<mosaic_0001>
module attributes {stable_mosaic.version = 11 : i64} {
  func.func @_phconv_kernel(%arg0: i32, %arg1: i32, %arg2: i32, %arg3: memref<1x16x48xbf16, #tpu.memory_space<vmem>>, %arg4: memref<1x1x16x128xbf16, #tpu.memory_space<vmem>>, %arg5: memref<1x1x16x128xbf16, #tpu.memory_space<vmem>>, %arg6: memref<1x16x128xf32, #tpu.memory_space<vmem>>) attributes {dimension_semantics = [#tpu.dimension_semantics<parallel>, #tpu.dimension_semantics<parallel>, #tpu.dimension_semantics<parallel>], iteration_bounds = array<i64: 2, 1, 1>, scalar_prefetch = 0 : i64, scratch_operands = 0 : i64, tpu.core_type = #tpu.core_type<tc>, window_params = [{transform_indices = @transform_0, window_bounds = array<i64: 1, 16, 48>}, {transform_indices = @transform_1, window_bounds = array<i64: 1, 1, 16, 128>}, {transform_indices = @transform_2, window_bounds = array<i64: 1, 1, 16, 128>}, {transform_indices = @transform_3, window_bounds = array<i64: 1, 16, 128>}]} {
    %c0 = arith.constant 0 : index
    %c0_0 = arith.constant 0 : index
    %c0_1 = arith.constant 0 : index
    %c0_2 = arith.constant 0 : index
    %0 = vector.load %arg4[%c0, %c0_0, %c0_1, %c0_2] : memref<1x1x16x128xbf16, #tpu.memory_space<vmem>>, vector<1x1x16x128xbf16>
    %1 = vector.shape_cast %0 : vector<1x1x16x128xbf16> to vector<16x128xbf16>
    %c0_3 = arith.constant 0 : index
    %c0_4 = arith.constant 0 : index
    %c0_5 = arith.constant 0 : index
    %c0_6 = arith.constant 0 : index
    %2 = vector.load %arg5[%c0_3, %c0_4, %c0_5, %c0_6] : memref<1x1x16x128xbf16, #tpu.memory_space<vmem>>, vector<1x1x16x128xbf16>
    %3 = vector.shape_cast %2 : vector<1x1x16x128xbf16> to vector<16x128xbf16>
    %4 = tpu.concatenate %1, %3 in 1 : vector<16x128xbf16>, vector<16x128xbf16> -> vector<16x256xbf16>
    %5 = vector.extract_strided_slice %4 {offsets = [0, 1], sizes = [16, 128], strides = [1, 1]} : vector<16x256xbf16> to vector<16x128xbf16>
    %6 = vector.extract_strided_slice %4 {offsets = [0, 2], sizes = [16, 128], strides = [1, 1]} : vector<16x256xbf16> to vector<16x128xbf16>
    %7 = tpu.concatenate %1, %5, %6 in 0 : vector<16x128xbf16>, vector<16x128xbf16>, vector<16x128xbf16> -> vector<48x128xbf16>
    %c0_7 = arith.constant 0 : index
    %c0_8 = arith.constant 0 : index
    %c0_9 = arith.constant 0 : index
    %8 = vector.load %arg3[%c0_7, %c0_8, %c0_9] : memref<1x16x48xbf16, #tpu.memory_space<vmem>>, vector<1x16x48xbf16>
    %9 = vector.shape_cast %8 : vector<1x16x48xbf16> to vector<16x48xbf16>
    %cst = arith.constant dense<0.000000e+00> : vector<16x128xf32>
    %10 = tpu.matmul %9, %7, %cst {dimension_numbers = #tpu.dot_dimension_numbers<[1], [0], [0], [1], [0, 0, 1, 1], [], []>} : vector<16x48xbf16>, vector<48x128xbf16>, vector<16x128xf32> -> vector<16x128xf32>
    %c0_10 = arith.constant 0 : index
    %c0_11 = arith.constant 0 : index
    %c0_12 = arith.constant 0 : index
    %11 = vector.load %arg6[%c0_10, %c0_11, %c0_12] : memref<1x16x128xf32, #tpu.memory_space<vmem>>, vector<1x16x128xf32>
    %12 = vector.shape_cast %11 : vector<1x16x128xf32> to vector<16x128xf32>
    %13 = vector.shape_cast %10 : vector<16x128xf32> to vector<1x16x128xf32>
    tpu.vector_store %arg6[%c0_10, %c0_11, %c0_12], %13 {strides = array<i32>} : memref<1x16x128xf32, #tpu.memory_space<vmem>>, vector<1x16x128xf32>,
    return
  }
  func.func @transform_0(%arg0: i32, %arg1: i32, %arg2: i32) -> (i32, i32, i32) {
    %c0_i32 = arith.constant 0 : i32
    %c0_i32_0 = arith.constant 0 : i32
    %c0_i32_1 = arith.constant 0 : i32
    return %c0_i32, %arg1, %c0_i32_0 : i32, i32, i32
  }
  func.func @transform_1(%arg0: i32, %arg1: i32, %arg2: i32) -> (i32, i32, i32, i32) {
    %c0_i32 = arith.constant 0 : i32
    %c0_i32_0 = arith.constant 0 : i32
    %c0_i32_1 = arith.constant 0 : i32
    return %arg0, %c0_i32, %c0_i32_0, %arg2 : i32, i32, i32, i32
  }
  func.func @transform_2(%arg0: i32, %arg1: i32, %arg2: i32) -> (i32, i32, i32, i32) {
    %c1_i32 = arith.constant 1 : i32
    %0 = arith.addi %arg2, %c1_i32 : i32
    %c1_i32_0 = arith.constant 1 : i32
    %1 = arith.muli %0, %c1_i32_0 : i32
    %c0_i32 = arith.constant 0 : i32
    %c0_i32_1 = arith.constant 0 : i32
    %c0_i32_2 = arith.constant 0 : i32
    return %arg0, %c0_i32, %c0_i32_1, %1 : i32, i32, i32, i32
  }
  func.func @transform_3(%arg0: i32, %arg1: i32, %arg2: i32) -> (i32, i32, i32) {
    %c0_i32 = arith.constant 0 : i32
    return %arg0, %arg1, %arg2 : i32, i32, i32
  }
}

</mosaic_0001>

<llo_original>
// kernel: _ph_conv1d.1
$region0: #{_ph_conv1d.1}
  #allocation0 [shape = 'u32[]', space=smem, size = 0x4, offset = 0x4, fixed_abs, tag = 'smem constant byte address 0x4 - core index']
  #allocation1 [shape = 'u32[144,128]{1,0:T(1,128)}', space=vmem, size = 0x12000, scoped, tag = 'internal scratch']
  %s0 = inlined_call_operand.hbm [shape: bf16[1,16,48], index: 0, kind: input, shape index: {}]
  %s1 = inlined_call_operand.hbm [shape: bf16[2,1,16,256], index: 1, kind: input, shape index: {}, may-alias: {1,2}]
  %s2 = inlined_call_operand.hbm [shape: bf16[2,1,16,256], index: 2, kind: input, shape index: {}, may-alias: {1,2}]
  %s3 = inlined_call_operand.hbm [shape: f32[2,16,128], index: 3, kind: output, shape index: {}]
  %s4 = sld [smem:[#allocation0]]
  $region57: #{_ph_conv1d.1} parent=0
    _
  %s6 = ssub.s32 1, %s4
  %s7 = scalar_select 0, %s6, %s4
  $region1: #{_ph_conv1d.1} parent=0
    #allocation2 [shape = 'u8[4096]{0}', space=vmem, size = 0x1000, scoped, tag = 'input window, operand 0, single buffered']
    #allocation3 [shape = 's32[2]{0}', space=sflag, size = 0x8, scoped, tag = 'scoped memory for _ph_conv1d.1']
    #allocation4 [shape = 's32[2]{0}', space=sflag, size = 0x8, scoped, tag = 'scoped memory for _ph_conv1d.1']
    #allocation5 [shape = 'u8[8192]{0}', space=vmem, size = 0x2000, scoped, tag = 'input window, operand 1']
    #allocation6 [shape = 's32[2]{0}', space=sflag, size = 0x8, scoped, tag = 'scoped memory for _ph_conv1d.1']
    #allocation7 [shape = 'u8[8192]{0}', space=vmem, size = 0x2000, scoped, tag = 'input window, operand 2']
    #allocation8 [shape = 'u8[16384]{0}', space=vmem, size = 0x4000, scoped, tag = 'output window, operand 0']
    %8 = vsyncpa [#allocation3], 0
    %9 = vsyncpa [#allocation6], 0
    %s10 = scalar_lea.sflag [#allocation6], 1
    %11 = vsyncpa %s10, 0
    %12 = vsyncpa [#allocation4], 0
    %s13 = scalar_lea.sflag [#allocation4], 1
    %14 = vsyncpa %s13, 0
    loop: start=0, step=1, limit=4
    $region2: #{_ph_conv1d.1} parent=1 // loop_pre_header
      _
    $region3: #{_ph_conv1d.1} parent=1 // loop_header
      %s16 = sphi 0, %s20
      %p17 = scmp.ge.s32.totalorder %s16, 4
      %s23 = sphi 0, %s42
      %s24 = sphi 0, %s38
      %s25 = sphi 0, %s34
      %s26 = sphi 0, %s23
      %s27 = sphi 0, %s24
      %s28 = sphi 0, %s25
      %s29 = sphi 0, %s26
      %s30 = sphi 0, %s27
      %s31 = sphi 0, %s28
      %s45 = sphi 0, %s47
      %s48 = sphi 0, %s45
      %s49 = sphi 0, %s48
      %s65 = sphi 0, %s49
      %s73 = sphi 0, %s75
      %s76 = sphi 0, %s73
      %s77 = sphi 0, %s76
      %s93 = sphi 0, %s77
      %s103 = sphi 0, %s105
      %s106 = sphi 0, %s103
      %s107 = sphi 0, %s106
      %s123 = sphi 0, %s107
      %s133 = sphi 0, %s135
      %s136 = sphi 0, %s133
      %s137 = sphi 0, %s136
      %s153 = sphi 0, %s137
    $region4: #{_ph_conv1d.1} parent=1 // loop_header_branch
      %19 = sbr.rel (%p17) target = $region8
    $region5: #{_ph_conv1d.1} parent=1 // loop_body
      %s21 = ssub.s32 %s16, 1
      %s22 = ssub.s32 %s16, 2
      %s32 = sadd.s32 1, %s25
      %p33 = scmp.ge.s32.totalorder %s32, 1
      %s34 = scalar_select %p33, 0, %s32
      %s35 = sadd.s32 1, %s24
      %s36 = scalar_select %p33, %s35, %s24
      %p37 = scmp.ge.s32.totalorder %s36, 1
      %s38 = scalar_select %p37, 0, %s36
      %s39 = sadd.s32 1, %s23
      %s40 = scalar_select %p37, %s39, %s23
      %p41 = scmp.ge.s32.totalorder %s40, 2
      %s42 = scalar_select %p41, 0, %s40
      %s43 = ssub.s32 %s24, %s38
      %p44 = scmp.eq.s32.totalorder %s43, 0
      %s46 = sadd.s32 %s45, 1
      %s47 = scalar_select %p44, %s45, %s46
      %p50 = pneg %p44
      %p51 = scmp.eq.s32.totalorder %s16, 1
      %p52 = por %p50, %p51
      %p53 = scmp.ne.s32.totalorder %s45, %s48
      %p54 = scmp.eq.s32.totalorder %s16, 0
      %p55 = por %p53, %p54
      %p56 = scmp.ne.s32.totalorder %s45, %s48
      %p57 = scmp.eq.s32.totalorder %s21, 1
      %p58 = por %p56, %p57
      %p59 = scmp.ne.s32.totalorder %s48, %s49
      %p60 = scmp.eq.s32.totalorder %s21, 0
      %p61 = por %p59, %p60
      %p62 = scmp.ne.s32.totalorder %s48, %s49
      %p63 = scmp.eq.s32.totalorder %s22, 1
      %p64 = por %p62, %p63
      %p66 = scmp.ne.s32.totalorder %s49, %s65
      %p67 = scmp.eq.s32.totalorder %s22, 0
      %p68 = por %p66, %p67
      %s69 = ssub.s32 %s23, %s42
      %s70 = ssub.s32 %s25, %s34
      %s71 = sor.u32 %s69, %s70
      %p72 = scmp.eq.s32.totalorder %s71, 0
      %s74 = sadd.s32 %s73, 1
      %s75 = scalar_select %p72, %s73, %s74
      %p78 = pneg %p72
      %p79 = scmp.eq.s32.totalorder %s16, 1
      %p80 = por %p78, %p79
      %p81 = scmp.ne.s32.totalorder %s73, %s76
      %p82 = scmp.eq.s32.totalorder %s16, 0
      %p83 = por %p81, %p82
      %p84 = scmp.ne.s32.totalorder %s73, %s76
      %p85 = scmp.eq.s32.totalorder %s21, 1
      %p86 = por %p84, %p85
      %p87 = scmp.ne.s32.totalorder %s76, %s77
      %p88 = scmp.eq.s32.totalorder %s21, 0
      %p89 = por %p87, %p88
      %p90 = scmp.ne.s32.totalorder %s76, %s77
      %p91 = scmp.eq.s32.totalorder %s22, 1
      %p92 = por %p90, %p91
      %p94 = scmp.ne.s32.totalorder %s77, %s93
      %p95 = scmp.eq.s32.totalorder %s22, 0
      %p96 = por %p94, %p95
      %s97 = sadd.s32 %s25, 1
      %s98 = sadd.s32 %s34, 1
      %s99 = ssub.s32 %s23, %s42
      %s100 = ssub.s32 %s97, %s98
      %s101 = sor.u32 %s99, %s100
      %p102 = scmp.eq.s32.totalorder %s101, 0
      %s104 = sadd.s32 %s103, 1
      %s105 = scalar_select %p102, %s103, %s104
      %p108 = pneg %p102
      %p109 = scmp.eq.s32.totalorder %s16, 1
      %p110 = por %p108, %p109
      %p111 = scmp.ne.s32.totalorder %s103, %s106
      %p112 = scmp.eq.s32.totalorder %s16, 0
      %p113 = por %p111, %p112
      %p114 = scmp.ne.s32.totalorder %s103, %s106
      %p115 = scmp.eq.s32.totalorder %s21, 1
      %p116 = por %p114, %p115
      %p117 = scmp.ne.s32.totalorder %s106, %s107
      %p118 = scmp.eq.s32.totalorder %s21, 0
      %p119 = por %p117, %p118
      %p120 = scmp.ne.s32.totalorder %s106, %s107
      %p121 = scmp.eq.s32.totalorder %s22, 1
      %p122 = por %p120, %p121
      %p124 = scmp.ne.s32.totalorder %s107, %s123
      %p125 = scmp.eq.s32.totalorder %s22, 0
      %p126 = por %p124, %p125
      %s127 = ssub.s32 %s23, %s42
      %s128 = ssub.s32 %s24, %s38
      %s129 = sor.u32 %s127, %s128
      %s130 = ssub.s32 %s25, %s34
      %s131 = sor.u32 %s129, %s130
      %p132 = scmp.eq.s32.totalorder %s131, 0
      %s134 = sadd.s32 %s133, 1
      %s135 = scalar_select %p132, %s133, %s134
      %p138 = pneg %p132
      %p139 = scmp.eq.s32.totalorder %s16, 1
      %p140 = por %p138, %p139
      %p141 = scmp.ne.s32.totalorder %s133, %s136
      %p142 = scmp.eq.s32.totalorder %s16, 0
      %p143 = por %p141, %p142
      %p144 = scmp.ne.s32.totalorder %s133, %s136
      %p145 = scmp.eq.s32.totalorder %s21, 1
      %p146 = por %p144, %p145
      %p147 = scmp.ne.s32.totalorder %s136, %s137
      %p148 = scmp.eq.s32.totalorder %s21, 0
      %p149 = por %p147, %p148
      %p150 = scmp.ne.s32.totalorder %s136, %s137
      %p151 = scmp.eq.s32.totalorder %s22, 1
      %p152 = por %p150, %p151
      %p154 = scmp.ne.s32.totalorder %s137, %s153
      %p155 = scmp.eq.s32.totalorder %s22, 0
      %p156 = por %p154, %p155
      %p157 = scmp.le.s32.totalorder 1, %s16
      %p158 = scmp.lt.s32.totalorder %s16, 3
      %p159 = pnand %p157, %p158
      %p160 = pneg %p159
      // Predicated region
      $region9: #{_ph_conv1d.1} parent=5 // pred_check
        _
      $region10: #{_ph_conv1d.1} parent=5 // pred_check_branch
        %162 = sbr.rel (%p159) target = $region12
      $region11: #{_ph_conv1d.1} parent=5 // pred_region
        %s163 = ssub.s32 %s16, 1
        // Predicated region
        $region13: #{_ph_conv1d.1} parent=11 // pred_check
          %p164 = pneg %p61
        $region14: #{_ph_conv1d.1} parent=11 // pred_check_branch
          %166 = sbr.rel (%p164) target = $region16
        $region15: #{_ph_conv1d.1} parent=11 // pred_region
          %s167 = smul.u32 2, %s27
          %s169 = ssub.s32 128, 128
          %170 = vsyncadd [#allocation3], %s169
          %s171 = smul.addr %s167, 64
          %s172 = scalar_lea.hbm %s0, %s171
          %s173 = sshll.u32 [#allocation2], 4
          %s174 = int_to_ptr.vmem [resolvable:$true] %s173
          %179 = dma.hbm_to_vmem [thread:$0]  %s172, 128, %s174, [#allocation3], 64, 64, 4
        $region16: #{_ph_conv1d.1} parent=11 // pred_fallthru
          _
      $region12: #{_ph_conv1d.1} parent=5 // pred_fallthru
        _
      %p180 = scmp.lt.s32.totalorder %s16, 2
      // Predicated region
      $region17: #{_ph_conv1d.1} parent=5 // pred_check
        %p181 = pneg %p180
      $region18: #{_ph_conv1d.1} parent=5 // pred_check_branch
        %183 = sbr.rel (%p181) target = $region20
      $region19: #{_ph_conv1d.1} parent=5 // pred_region
        // Predicated region
        $region21: #{_ph_conv1d.1} parent=19 // pred_check
          %p184 = pneg %p83
        $region22: #{_ph_conv1d.1} parent=19 // pred_check_branch
          %186 = sbr.rel (%p184) target = $region24
        $region23: #{_ph_conv1d.1} parent=19 // pred_region
          %s187 = sand.u32 %s16, 1
          %s188 = scalar_lea.sflag [#allocation6], %s187
          %s189 = sand.u32 %s73, 1
          %s190 = smul.addr %s189, 8
          %s191 = scalar_lea.vmem [#allocation5], %s190
          %s193 = ssub.s32 128, 128
          %194 = vsyncadd %s188, %s193
          %s195 = smul.addr %s23, 4
          %s196 = sadd.s32 %s25, %s195
          %s197 = smul.addr %s196, 64
          %s198 = scalar_lea.hbm %s1, %s197
          %s199 = sshll.u32 %s191, 4
          %s200 = int_to_ptr.vmem [resolvable:$true] %s199
          %205 = dma.hbm_to_vmem [thread:$0]  %s198, 128, %s200, %s188, 128, 64, 4
        $region24: #{_ph_conv1d.1} parent=19 // pred_fallthru
          _
        // Predicated region
        $region25: #{_ph_conv1d.1} parent=19 // pred_check
          %p206 = pneg %p113
        $region26: #{_ph_conv1d.1} parent=19 // pred_check_branch
          %208 = sbr.rel (%p206) target = $region28
        $region27: #{_ph_conv1d.1} parent=19 // pred_region
          %s209 = sand.u32 %s16, 1
          %s210 = scalar_lea.sflag [#allocation6], %s209
          %s211 = sand.u32 %s103, 1
          %s212 = smul.addr %s211, 8
          %s213 = scalar_lea.vmem [#allocation7], %s212
          %s214 = sadd.s32 %s25, 1
          %s216 = ssub.s32 128, 128
          %217 = vsyncadd %s210, %s216
          %s218 = smul.addr %s23, 4
          %s219 = sadd.s32 %s214, %s218
          %s220 = smul.addr %s219, 64
          %s221 = scalar_lea.hbm %s2, %s220
          %s222 = sshll.u32 %s213, 4
          %s223 = int_to_ptr.vmem [resolvable:$true] %s222
          %228 = dma.hbm_to_vmem [thread:$0]  %s221, 128, %s223, %s210, 128, 64, 4
        $region28: #{_ph_conv1d.1} parent=19 // pred_fallthru
          _
      $region20: #{_ph_conv1d.1} parent=5 // pred_fallthru
        _
      %p229 = scmp.le.s32.totalorder 1, %s16
      %p230 = scmp.lt.s32.totalorder %s16, 3
      %p231 = pnand %p229, %p230
      %p232 = pneg %p231
      // Predicated region
      $region29: #{_ph_conv1d.1} parent=5 // pred_check
        _
      $region30: #{_ph_conv1d.1} parent=5 // pred_check_branch
        %234 = sbr.rel (%p231) target = $region32
      $region31: #{_ph_conv1d.1} parent=5 // pred_region
        %s235 = ssub.s32 %s16, 1
        // Predicated region
        $region33: #{_ph_conv1d.1} parent=31 // pred_check
          %p236 = pneg %p61
        $region34: #{_ph_conv1d.1} parent=31 // pred_check_branch
          %238 = sbr.rel (%p236) target = $region36
        $region35: #{_ph_conv1d.1} parent=31 // pred_region
          %239 = dma.done [#allocation3], 128
        $region36: #{_ph_conv1d.1} parent=31 // pred_fallthru
          _
        %s240 = sand.u32 %s21, 1
        %s241 = scalar_lea.sflag [#allocation6], %s240
        %s242 = sand.u32 %s76, 1
        %s243 = smul.addr %s242, 8
        %s244 = scalar_lea.vmem [#allocation5], %s243
        // Predicated region
        $region37: #{_ph_conv1d.1} parent=31 // pred_check
          %p245 = pneg %p89
        $region38: #{_ph_conv1d.1} parent=31 // pred_check_branch
          %247 = sbr.rel (%p245) target = $region40
        $region39: #{_ph_conv1d.1} parent=31 // pred_region
          %248 = dma.done %s241, 128
        $region40: #{_ph_conv1d.1} parent=31 // pred_fallthru
          _
        %s249 = sand.u32 %s21, 1
        %s250 = scalar_lea.sflag [#allocation6], %s249
        %s251 = sand.u32 %s106, 1
        %s252 = smul.addr %s251, 8
        %s253 = scalar_lea.vmem [#allocation7], %s252
        // Predicated region
        $region41: #{_ph_conv1d.1} parent=31 // pred_check
          %p254 = pneg %p119
        $region42: #{_ph_conv1d.1} parent=31 // pred_check_branch
          %256 = sbr.rel (%p254) target = $region44
        $region43: #{_ph_conv1d.1} parent=31 // pred_region
          %257 = dma.done %s250, 128
        $region44: #{_ph_conv1d.1} parent=31 // pred_fallthru
          _
        %p258 = pneg %p61
        %p259 = pneg %p58
        %s260 = sand.u32 %s21, 1
        %s261 = scalar_lea.sflag [#allocation6], %s260
        %s262 = sand.u32 %s76, 1
        %s263 = smul.addr %s262, 8
        %s264 = scalar_lea.vmem [#allocation5], %s263
        %p265 = pneg %p89
        %p266 = pneg %p86
        %s267 = sand.u32 %s21, 1
        %s268 = scalar_lea.sflag [#allocation6], %s267
        %s269 = sand.u32 %s106, 1
        %s270 = smul.addr %s269, 8
        %s271 = scalar_lea.vmem [#allocation7], %s270
        %p272 = pneg %p119
        %p273 = pneg %p116
        %p274 = pneg %p149
        %p275 = pneg %p146
        %s276 = sand.u32 %s136, 1
        %s277 = scalar_lea.sflag [#allocation4], %s276
        %s278 = sand.u32 %s136, 1
        %s279 = smul.addr %s278, 16
        %s280 = scalar_lea.vmem [#allocation8], %s279
        %s281 = smul.u32 2, %s27
        %s282 = sadd.s32 %s28, 1
        %s283 = smul.u32 2, %s27
        %v285 = vld [vmem:[%s244] sm:$0xf]
        %v286 = vld [vmem:[%s244 + $0x4] sm:$0xf]
        %v287 = vld [vmem:[%s253] sm:$0xf]
        %v288 = vld [vmem:[%s253 + $0x4] sm:$0xf]
        %v291 = vunpack.c.l.b16 %v285
        %v292 = vunpack.c.l.b16 %v286
        %v293 = vpack.c.b16 %v292, %v291
        %v296 = vunpack.c.l.b16 %v287
        %v297 = vunpack.c.l.b16 %v288
        %v298 = vpack.c.b16 %v297, %v296
        %300 = vrot.lane.b32.xlu0 %v293, 127
        %v301 = vpop.permute.xlu0 %300
        %302 = vrot.lane.b32.xlu0 %v298, 127
        %v303 = vpop.permute.xlu0 %302
        %vm304 = vcmask 1039360
        %v305 = vsel %vm304, %v301, %v303
        %307 = vrot.lane.b32.xlu0 %v293, 126
        %v308 = vpop.permute.xlu0 %307
        %309 = vrot.lane.b32.xlu0 %v298, 126
        %v310 = vpop.permute.xlu0 %309
        %vm311 = vcmask 1031168
        %v312 = vsel %vm311, %v308, %v310
        %v314 = vld [vmem:[#allocation2] sm:$0xf]
        %v315 = vld [vmem:[#allocation2 + $0x4] sm:$0xf]
        %v318 = vunpack.c.l.b16 %v314
        %v319 = vunpack.c.l.b16 %v315
        %v320 = vpack.c.b16 %v319, %v318
        %vm321 = vcmask 392192
        %v323 = vsel %vm321, %v320, 0
        %325 = vmatprep.subr.bf16.mxu0 0
        %326 = vmatpush1.bf16.msra.mxu0 %v293
        %327 = vmatprep.subr.bf16.mxu0 0
        %328 = vmatpush1.bf16.msra.mxu0 %v305
        %329 = vmatprep.subr.bf16.mxu0 0
        %330 = vmatpush1.bf16.msra.mxu0 %v312
        %331 = vmatprep.subr.bf16.mxu0 0
        %332 = vmatpush1.bf16.msra.mxu0 0
        %333 = vmatprep.subr.bf16.mxu0 0
        %334 = vmatpush1.bf16.msra.mxu0 0
        %335 = vmatprep.subr.bf16.mxu0 0
        %336 = vmatpush1.bf16.msra.mxu0 0
        %337 = vmatprep.subr.bf16.mxu0 0
        %338 = vmatpush1.bf16.msra.mxu0 0
        %339 = vmatprep.subr.bf16.mxu0 0
        %340 = vmatpush1.bf16.msra.mxu0 0
        %341 = vmatprep.subr.bf16.mxu0 0
        %342 = vmatpush1.bf16.msra.mxu0 0
        %343 = vmatprep.subr.bf16.mxu0 0
        %344 = vmatpush1.bf16.msra.mxu0 0
        %345 = vmatprep.subr.bf16.mxu0 0
        %346 = vmatpush1.bf16.msra.mxu0 0
        %347 = vmatprep.subr.bf16.mxu0 0
        %348 = vmatpush1.bf16.msra.mxu0 0
        %349 = vmatprep.subr.bf16.mxu0 0
        %350 = vmatpush1.bf16.msra.mxu0 0
        %351 = vmatprep.subr.bf16.mxu0 0
        %352 = vmatpush1.bf16.msra.mxu0 0
        %353 = vmatprep.subr.bf16.mxu0 0
        %354 = vmatpush1.bf16.msra.mxu0 0
        %355 = vmatprep.subr.bf16.mxu0 0
        %356 = vmatpush1.bf16.msra.mxu0 0
        %357 = vmatprep.mubr.bf16.mxu0 0
        %358 = vmatmul.mubr.bf16.gmra.mrb[0].mxu0 %v323
        %v359 = vpop.f32.mrb[0].mxu0
        %v360 = vadd.f32 0.0, %v359
        %v361 = vpop.f32.mrb[0].mxu0
        %v362 = vpop.f32.mrb[0].mxu0
        %v363 = vadd.f32 0.0, %v362
        %v364 = vpop.f32.mrb[0].mxu0
        %365 = vdwg.mxu0
        %366 = vst [vmem:[%s280] sm:$0xff] %v360
        %367 = vst [vmem:[%s280 + $0x8] sm:$0xff] %v363
        %s368 = sand.u32 %s136, 1
        %s369 = scalar_lea.sflag [#allocation4], %s368
        %s370 = sand.u32 %s136, 1
        %s371 = smul.addr %s370, 16
        %s372 = scalar_lea.vmem [#allocation8], %s371
        // Predicated region
        $region45: #{_ph_conv1d.1} parent=31 // pred_check
          %p373 = pneg %p146
        $region46: #{_ph_conv1d.1} parent=31 // pred_check_branch
          %375 = sbr.rel (%p373) target = $region48
        $region47: #{_ph_conv1d.1} parent=31 // pred_region
          %s376 = smul.u32 2, %s27
          %s378 = ssub.s32 256, 256
          %379 = vsyncadd %s369, %s378
          %s380 = sadd.s32 %s28, %s376
          %s381 = smul.addr %s26, 2
          %s382 = sadd.s32 %s380, %s381
          %s383 = smul.addr %s382, 128
          %s384 = scalar_lea.hbm %s3, %s383
          %s385 = sshll.u32 %s372, 4
          %s386 = int_to_ptr.vmem [resolvable:$true] %s385
          %391 = dma.vmem_to_hbm [thread:$0]  %s386, 256, %s384, %s369, 128, 128, 8
        $region48: #{_ph_conv1d.1} parent=31 // pred_fallthru
          _
      $region32: #{_ph_conv1d.1} parent=5 // pred_fallthru
        _
      %p392 = scmp.le.s32.totalorder 2, %s16
      // Predicated region
      $region49: #{_ph_conv1d.1} parent=5 // pred_check
        %p393 = pneg %p392
      $region50: #{_ph_conv1d.1} parent=5 // pred_check_branch
        %395 = sbr.rel (%p393) target = $region52
      $region51: #{_ph_conv1d.1} parent=5 // pred_region
        %s396 = ssub.s32 %s16, 2
        // Predicated region
        $region53: #{_ph_conv1d.1} parent=51 // pred_check
          %p397 = pneg %p152
        $region54: #{_ph_conv1d.1} parent=51 // pred_check_branch
          %399 = sbr.rel (%p397) target = $region56
        $region55: #{_ph_conv1d.1} parent=51 // pred_region
          %s400 = sand.u32 %s137, 1
          %s401 = scalar_lea.sflag [#allocation4], %s400
          %s402 = sand.u32 %s137, 1
          %s403 = smul.addr %s402, 16
          %s404 = scalar_lea.vmem [#allocation8], %s403
          %405 = dma.done %s401, 256
        $region56: #{_ph_conv1d.1} parent=51 // pred_fallthru
          _
      $region52: #{_ph_conv1d.1} parent=5 // pred_fallthru
        _
    $region6: #{_ph_conv1d.1} parent=1 // loop_footer
      %s20 = sadd.s32 1, %s16
    $region7: #{_ph_conv1d.1} parent=1 // loop_footer_branch
      %15 = sbr.rel target = $region3
    $region8: #{_ph_conv1d.1} parent=1 // loop_exit
      _
    %406 = vsyncpa [#allocation3], 1
    %s407 = scalar_lea.sflag [#allocation3], 1
    %408 = vsyncpa %s407, 1
    %409 = vsyncpa [#allocation6], 1
    %s410 = scalar_lea.sflag [#allocation6], 1
    %411 = vsyncpa %s410, 1
    %412 = vsyncpa [#allocation4], 1
    %s413 = scalar_lea.sflag [#allocation4], 1
    %414 = vsyncpa %s413, 1

</llo_original>
